<compile_context>
chip_gen: v5e
topology: v5e:2x2
jax: 0.10.0
libtpu: 0.0.40
codegen_flags: <defaults>
</compile_context>

<pallas_src>
import functools

import jax
import jax.numpy as jnp
from jax.experimental import pallas as pl
from jax.experimental.pallas import tpu as pltpu


def _sublane_multiple(dtype) -> int:
    """Minimum second-minor tile multiple for a dtype (sublane packing)."""
    itemsize = jnp.dtype(dtype).itemsize
    return max(8, 32 // itemsize)        # f32 -> 8, bf16 -> 16, int8/fp8 -> 32


def _round_up(a: int, b: int) -> int:
    return -(-a // b) * b


def _cdiv(a: int, b: int) -> int:
    return -(-a // b)


def _output_kernel(x_ref, w_ref, b_ref, res_ref, g_ref, beta_ref, o_ref, acc_ref,
                   *, eps, mxu_dtype):
    # x: (tm, tk)  w: (tk, H)  b/g/beta: (1, H)  res: (tm, H)  acc: (tm, H) f32
    k = pl.program_id(1)

    @pl.when(k == 0)
    def _():
        acc_ref[...] = jnp.zeros_like(acc_ref)

    # MXU matmul in bf16 (or forced dtype); f32 accumulation in VMEM scratch.
    acc_ref[...] += jnp.dot(x_ref[...].astype(mxu_dtype),
                            w_ref[...].astype(mxu_dtype),
                            preferred_element_type=jnp.float32)

    @pl.when(k == pl.num_programs(1) - 1)
    def _():
        y = acc_ref[...] + b_ref[...].astype(jnp.float32)
        # Dropout is identity in eval mode; residual add (epilogue in f32).
        y = y + res_ref[...].astype(jnp.float32)

        # Two-pass LayerNorm: mean first, then (y - mean)^2 (no cancellation).
        inv_h = jnp.float32(1.0 / y.shape[-1])
        mean = jnp.sum(y, axis=-1, keepdims=True) * inv_h
        yc = y - mean
        var = jnp.sum(yc * yc, axis=-1, keepdims=True) * inv_h
        normed = yc * jax.lax.rsqrt(var + jnp.float32(eps))
        out = normed * g_ref[...].astype(jnp.float32) + beta_ref[...].astype(jnp.float32)
        o_ref[...] = out.astype(o_ref.dtype)


def output_forward(hidden_states, input_tensor, weight, bias, gamma, beta,
                   *, eps=1e-12, tm=512, mxu_dtype=None, force_tk=None):
    """hidden_states: [B, S, 4H], input_tensor: [B, S, H] -> [B, S, H]."""
    B, S, H4 = hidden_states.shape
    H = input_tensor.shape[-1]
    assert H4 == 4 * H

    M = B * S
    out_dtype = hidden_states.dtype

    # MXU feed dtype: bf16-native on v5e/v6e/v7x.  Weight cast once here;
    # activations cast per-tile in the kernel (keeps the x DMA at 1x bytes).
    if mxu_dtype is None:
        mxu_dtype = (jnp.bfloat16 if jnp.dtype(hidden_states.dtype) == jnp.dtype(jnp.float32)
                     else hidden_states.dtype)
    w = weight if jnp.dtype(weight.dtype) == jnp.dtype(mxu_dtype) else weight.astype(mxu_dtype)

    # Per-generation VMEM ceiling (128 MiB v5e/v6e, 64 MiB v7x); safe fallback.
    try:
        cap = int(getattr(pltpu.get_tpu_info(), "vmem_capacity_bytes", 0)) or (64 << 20)
    except Exception:
        cap = 64 << 20
    vmem_ceiling = max(int(cap * 0.85), 16 << 20)

    # Row tile: aligned to sublane packing, capped at the row count, and split
    # so grid_m >= 2 whenever there is enough work (v7x megacore sharding).
    align = max(_sublane_multiple(hidden_states.dtype),
                _sublane_multiple(input_tensor.dtype),
                _sublane_multiple(out_dtype))
    tm = max(align, _round_up(min(tm, M), align))
    if M > align:
        tm = min(tm, max(align, _round_up(_cdiv(M, 2), align)))
    grid_m = _cdiv(M, tm)

    # K tile over 4H: resident weight unless it would blow the VMEM budget,
    # then the largest 128-multiple divisor of 4H that fits double-buffered.
    w_itemsize = jnp.dtype(mxu_dtype).itemsize
    if force_tk is not None:
        tk = force_tk
    else:
        tk = H4
        if H4 >= 256 and H4 * H * w_itemsize > vmem_ceiling // 3:
            t = (H4 // 128) * 128
            while t >= 128:
                if H4 % t == 0 and 2 * t * H * w_itemsize <= vmem_ceiling // 3:
                    tk = t
                    break
                t -= 128
    assert H4 % tk == 0, "K tile must divide 4H"
    grid_k = H4 // tk

    x = hidden_states.reshape(M, H4)
    res = input_tensor.reshape(M, H)
    b2 = bias.reshape(1, H)
    g2 = gamma.reshape(1, H)
    beta2 = beta.reshape(1, H)

    # Tight VMEM estimate (single-buffered invariants, double-buffered tiles).
    def nbytes(shape, dt):
        n = 1
        for d in shape:
            n *= d
        return n * jnp.dtype(dt).itemsize

    w_bufs = 1 if grid_k == 1 else 2
    est = (w_bufs * nbytes((tk, H), mxu_dtype)
           + 2 * nbytes((tm, tk), x.dtype)
           + 2 * nbytes((tm, H), res.dtype)
           + 2 * nbytes((tm, H), out_dtype)
           + 3 * nbytes((1, H), jnp.float32)
           + nbytes((tm, H), jnp.float32)           # f32 accumulator scratch
           + nbytes((tm, tk), mxu_dtype)            # per-tile bf16 cast of x
           + 3 * nbytes((tm, H), jnp.float32))      # f32 epilogue temporaries
    vmem_limit = min(max(int(est * 1.25) + (2 << 20), 16 << 20), vmem_ceiling)

    kernel = functools.partial(_output_kernel, eps=eps, mxu_dtype=mxu_dtype)

    def run(single_buffer_invariants: bool):
        def invariant(shape, imap):
            if single_buffer_invariants:
                return pl.BlockSpec(shape, imap, pipeline_mode=pl.Buffered(1))
            return pl.BlockSpec(shape, imap)

        if grid_k == 1:
            w_spec = invariant((tk, H), lambda i, k: (0, 0))   # resident weight
        else:
            w_spec = pl.BlockSpec((tk, H), lambda i, k: (k, 0))

        return pl.pallas_call(
            kernel,
            out_shape=jax.ShapeDtypeStruct((M, H), out_dtype),
            grid_spec=pltpu.PrefetchScalarGridSpec(
                num_scalar_prefetch=0,
                grid=(grid_m, grid_k),
                in_specs=[
                    pl.BlockSpec((tm, tk), lambda i, k: (i, k)),   # x rows / K slice
                    w_spec,                                        # dense weight
                    invariant((1, H), lambda i, k: (0, 0)),        # dense bias
                    pl.BlockSpec((tm, H), lambda i, k: (i, 0)),    # residual rows
                    invariant((1, H), lambda i, k: (0, 0)),        # LN gamma
                    invariant((1, H), lambda i, k: (0, 0)),        # LN beta
                ],
                out_specs=pl.BlockSpec((tm, H), lambda i, k: (i, 0)),
                scratch_shapes=[pltpu.VMEM((tm, H), jnp.float32)],
            ),
            compiler_params=pltpu.CompilerParams(
                dimension_semantics=("parallel", "arbitrary"),
                vmem_limit_bytes=vmem_limit),
        )(x, w, b2, res, g2, beta2)

    try:
        out = run(True)
    except Exception:
        # Fallback for jax builds without BlockSpec pipeline_mode support.
        out = run(False)

    return out.reshape(B, S, H)


def _reference(hidden_states, input_tensor, weight, bias, gamma, beta, eps):
    B, S, H4 = hidden_states.shape
    H = input_tensor.shape[-1]
    ref = hidden_states.reshape(-1, H4) @ weight + bias
    ref = ref + input_tensor.reshape(-1, H)
    mu = ref.mean(axis=-1, keepdims=True)
    var = ((ref - mu) ** 2).mean(axis=-1, keepdims=True)
    ref = (ref - mu) / jnp.sqrt(var + eps) * gamma + beta
    return ref.reshape(B, S, H)


if __name__ == "__main__":
    eps = 1e-12
    key = jax.random.PRNGKey(0)
    ks = jax.random.split(key, 10)

    # config.kernel_size = 32  ->  dense: 128 -> 32, LayerNorm(32)
    H = 32
    H4 = 4 * H
    bound = 1.0 / (H4 ** 0.5)
    weight = jax.random.uniform(ks[0], (H4, H), jnp.float32, -bound, bound)
    bias = jax.random.uniform(ks[1], (H,), jnp.float32, -bound, bound)
    gamma = jnp.ones((H,), jnp.float32)     # nn.LayerNorm default init
    beta = jnp.zeros((H,), jnp.float32)

    # Case 1: demo shape, default bf16-fed MXU fast path (loose tolerance).
    B, S = 2, 8
    hs = jax.random.normal(ks[2], (B, S, H4), jnp.float32)
    it = jax.random.normal(ks[3], (B, S, H), jnp.float32)
    out = jax.block_until_ready(output_forward(hs, it, weight, bias, gamma, beta, eps=eps))
    ref = _reference(hs, it, weight, bias, gamma, beta, eps)
    assert jnp.allclose(out, ref, atol=3e-2, rtol=3e-2), "mismatch (case 1, bf16 MXU)"

    # Case 2: ragged row count (exercises Pallas last-block masking), exact f32.
    B2, S2 = 3, 5
    hs2 = jax.random.normal(ks[4], (B2, S2, H4), jnp.float32)
    it2 = jax.random.normal(ks[5], (B2, S2, H), jnp.float32)
    out2 = jax.block_until_ready(output_forward(hs2, it2, weight, bias, gamma, beta,
                                                eps=eps, mxu_dtype=jnp.float32))
    ref2 = _reference(hs2, it2, weight, bias, gamma, beta, eps)
    assert jnp.allclose(out2, ref2, atol=1e-5, rtol=1e-5), "mismatch (case 2, ragged M)"

    # Case 3: forced K-tiled reduction path (large-H / v7x route), exact f32.
    H3 = 128
    H43 = 4 * H3
    bound3 = 1.0 / (H43 ** 0.5)
    w3 = jax.random.uniform(ks[6], (H43, H3), jnp.float32, -bound3, bound3)
    b3 = jax.random.uniform(ks[7], (H3,), jnp.float32, -bound3, bound3)
    g3 = jnp.ones((H3,), jnp.float32)
    be3 = jnp.zeros((H3,), jnp.float32)
    hs3 = jax.random.normal(ks[8], (2, 8, H43), jnp.float32)
    it3 = jax.random.normal(ks[9], (2, 8, H3), jnp.float32)
    out3 = jax.block_until_ready(output_forward(hs3, it3, w3, b3, g3, be3, eps=eps,
                                                mxu_dtype=jnp.float32, force_tk=128))
    ref3 = _reference(hs3, it3, w3, b3, g3, be3, eps)
    assert jnp.allclose(out3, ref3, atol=1e-4, rtol=1e-4), "mismatch (case 3, K-tiled)"

    print("KERNEL_OK")
</pallas_src>

<mosaic_0001>
module attributes {stable_mosaic.version = 11 : i64} {
  func.func @_output_kernel(%arg0: i32, %arg1: i32, %arg2: memref<8x128xf32, #tpu.memory_space<vmem>>, %arg3: memref<128x32xbf16, #tpu.memory_space<vmem>>, %arg4: memref<1x32xf32, #tpu.memory_space<vmem>>, %arg5: memref<8x32xf32, #tpu.memory_space<vmem>>, %arg6: memref<1x32xf32, #tpu.memory_space<vmem>>, %arg7: memref<1x32xf32, #tpu.memory_space<vmem>>, %arg8: memref<8x32xf32, #tpu.memory_space<vmem>>, %arg9: memref<8x32xf32, #tpu.memory_space<vmem>>) attributes {dimension_semantics = [#tpu.dimension_semantics<parallel>, #tpu.dimension_semantics<arbitrary>], iteration_bounds = array<i64: 2, 1>, scalar_prefetch = 0 : i64, scratch_operands = 1 : i64, tpu.core_type = #tpu.core_type<tc>, window_params = [{transform_indices = @transform_0, window_bounds = array<i64: 8, 128>}, {pipeline_mode = #tpu.pipeline_mode<synchronous>, transform_indices = @transform_1, window_bounds = array<i64: 128, 32>}, {pipeline_mode = #tpu.pipeline_mode<synchronous>, transform_indices = @transform_2, window_bounds = array<i64: 1, 32>}, {transform_indices = @transform_3, window_bounds = array<i64: 8, 32>}, {pipeline_mode = #tpu.pipeline_mode<synchronous>, transform_indices = @transform_4, window_bounds = array<i64: 1, 32>}, {pipeline_mode = #tpu.pipeline_mode<synchronous>, transform_indices = @transform_5, window_bounds = array<i64: 1, 32>}, {transform_indices = @transform_6, window_bounds = array<i64: 8, 32>}]} {
    %c0_i32 = arith.constant 0 : i32
    %0 = arith.cmpi eq, %arg1, %c0_i32 : i32
    %1 = arith.extui %0 : i1 to i32
    %c0_i32_0 = arith.constant 0 : i32
    %2 = arith.cmpi ne, %1, %c0_i32_0 : i32
    scf.if %2 {
      %cst_10 = arith.constant 0.000000e+00 : f32
      %13 = vector.broadcast %cst_10 : f32 to vector<8x32xf32>
      %c0_11 = arith.constant 0 : index
      %c0_12 = arith.constant 0 : index
      %14 = vector.load %arg9[%c0_11, %c0_12] : memref<8x32xf32, #tpu.memory_space<vmem>>, vector<8x32xf32>
      tpu.vector_store %arg9[%c0_11, %c0_12], %13 {strides = array<i32>} : memref<8x32xf32, #tpu.memory_space<vmem>>, vector<8x32xf32>,
    } else {
    }
    %c0 = arith.constant 0 : index
    %c0_1 = arith.constant 0 : index
    %3 = vector.load %arg9[%c0, %c0_1] : memref<8x32xf32, #tpu.memory_space<vmem>>, vector<8x32xf32>
    %c0_2 = arith.constant 0 : index
    %c0_3 = arith.constant 0 : index
    %4 = vector.load %arg2[%c0_2, %c0_3] : memref<8x128xf32, #tpu.memory_space<vmem>>, vector<8x128xf32>
    %5 = arith.truncf %4 : vector<8x128xf32> to vector<8x128xbf16>
    %c0_4 = arith.constant 0 : index
    %c0_5 = arith.constant 0 : index
    %6 = vector.load %arg3[%c0_4, %c0_5] : memref<128x32xbf16, #tpu.memory_space<vmem>>, vector<128x32xbf16>
    %cst = arith.constant dense<0.000000e+00> : vector<8x32xf32>
    %7 = tpu.matmul %5, %6, %cst {dimension_numbers = #tpu.dot_dimension_numbers<[1], [0], [0], [1], [0, 0, 1, 1], [], []>} : vector<8x128xbf16>, vector<128x32xbf16>, vector<8x32xf32> -> vector<8x32xf32>
    %8 = arith.addf %3, %7 : vector<8x32xf32>
    %c0_6 = arith.constant 0 : index
    %c0_7 = arith.constant 0 : index
    %9 = vector.load %arg9[%c0_6, %c0_7] : memref<8x32xf32, #tpu.memory_space<vmem>>, vector<8x32xf32>
    tpu.vector_store %arg9[%c0_6, %c0_7], %8 {strides = array<i32>} : memref<8x32xf32, #tpu.memory_space<vmem>>, vector<8x32xf32>,
    %c0_i32_8 = arith.constant 0 : i32
    %10 = arith.cmpi eq, %arg1, %c0_i32_8 : i32
    %11 = arith.extui %10 : i1 to i32
    %c0_i32_9 = arith.constant 0 : i32
    %12 = arith.cmpi ne, %11, %c0_i32_9 : i32
    scf.if %12 {
      %c0_10 = arith.constant 0 : index
      %c0_11 = arith.constant 0 : index
      %13 = vector.load %arg9[%c0_10, %c0_11] : memref<8x32xf32, #tpu.memory_space<vmem>>, vector<8x32xf32>
      %c0_12 = arith.constant 0 : index
      %c0_13 = arith.constant 0 : index
      %14 = vector.load %arg4[%c0_12, %c0_13] : memref<1x32xf32, #tpu.memory_space<vmem>>, vector<1x32xf32>
      %15 = vector.broadcast %14 : vector<1x32xf32> to vector<8x32xf32>
      %16 = arith.addf %13, %15 : vector<8x32xf32>
      %c0_14 = arith.constant 0 : index
      %c0_15 = arith.constant 0 : index
      %17 = vector.load %arg5[%c0_14, %c0_15] : memref<8x32xf32, #tpu.memory_space<vmem>>, vector<8x32xf32>
      %18 = arith.addf %16, %17 : vector<8x32xf32>
      %cst_16 = arith.constant dense<0.000000e+00> : vector<8xf32>
      %19 = vector.multi_reduction <add>, %18, %cst_16 [1] : vector<8x32xf32> to vector<8xf32>
      %20 = vector.shape_cast %19 : vector<8xf32> to vector<8x1xf32>
      %cst_17 = arith.constant 3.125000e-02 : f32
      %21 = vector.broadcast %cst_17 : f32 to vector<8x1xf32>
      %22 = arith.mulf %20, %21 : vector<8x1xf32>
      %23 = vector.broadcast %22 : vector<8x1xf32> to vector<8x32xf32>
      %24 = arith.subf %18, %23 : vector<8x32xf32>
      %25 = arith.mulf %24, %24 : vector<8x32xf32>
      %cst_18 = arith.constant dense<0.000000e+00> : vector<8xf32>
      %26 = vector.multi_reduction <add>, %25, %cst_18 [1] : vector<8x32xf32> to vector<8xf32>
      %27 = vector.shape_cast %26 : vector<8xf32> to vector<8x1xf32>
      %cst_19 = arith.constant 3.125000e-02 : f32
      %28 = vector.broadcast %cst_19 : f32 to vector<8x1xf32>
      %29 = arith.mulf %27, %28 : vector<8x1xf32>
      %cst_20 = arith.constant 9.99999996E-13 : f32
      %30 = vector.broadcast %cst_20 : f32 to vector<8x1xf32>
      %31 = arith.addf %29, %30 : vector<8x1xf32>
      %32 = math.rsqrt %31 : vector<8x1xf32>
      %33 = vector.broadcast %32 : vector<8x1xf32> to vector<8x32xf32>
      %34 = arith.mulf %24, %33 : vector<8x32xf32>
      %c0_21 = arith.constant 0 : index
      %c0_22 = arith.constant 0 : index
      %35 = vector.load %arg6[%c0_21, %c0_22] : memref<1x32xf32, #tpu.memory_space<vmem>>, vector<1x32xf32>
      %36 = vector.broadcast %35 : vector<1x32xf32> to vector<8x32xf32>
      %37 = arith.mulf %34, %36 : vector<8x32xf32>
      %c0_23 = arith.constant 0 : index
      %c0_24 = arith.constant 0 : index
      %38 = vector.load %arg7[%c0_23, %c0_24] : memref<1x32xf32, #tpu.memory_space<vmem>>, vector<1x32xf32>
      %39 = vector.broadcast %38 : vector<1x32xf32> to vector<8x32xf32>
      %40 = arith.addf %37, %39 : vector<8x32xf32>
      %c0_25 = arith.constant 0 : index
      %c0_26 = arith.constant 0 : index
      %41 = vector.load %arg8[%c0_25, %c0_26] : memref<8x32xf32, #tpu.memory_space<vmem>>, vector<8x32xf32>
      tpu.vector_store %arg8[%c0_25, %c0_26], %40 {strides = array<i32>} : memref<8x32xf32, #tpu.memory_space<vmem>>, vector<8x32xf32>,
    } else {
    }
    return
  }
  func.func @transform_0(%arg0: i32, %arg1: i32) -> (i32, i32) {
    %c0_i32 = arith.constant 0 : i32
    return %arg0, %arg1 : i32, i32
  }
  func.func @transform_1(%arg0: i32, %arg1: i32) -> (i32, i32) {
    %c0_i32 = arith.constant 0 : i32
    %c0_i32_0 = arith.constant 0 : i32
    %c0_i32_1 = arith.constant 0 : i32
    return %c0_i32, %c0_i32_0 : i32, i32
  }
  func.func @transform_2(%arg0: i32, %arg1: i32) -> (i32, i32) {
    %c0_i32 = arith.constant 0 : i32
    %c0_i32_0 = arith.constant 0 : i32
    %c0_i32_1 = arith.constant 0 : i32
    return %c0_i32, %c0_i32_0 : i32, i32
  }
  func.func @transform_3(%arg0: i32, %arg1: i32) -> (i32, i32) {
    %c0_i32 = arith.constant 0 : i32
    %c0_i32_0 = arith.constant 0 : i32
    return %arg0, %c0_i32 : i32, i32
  }
  func.func @transform_4(%arg0: i32, %arg1: i32) -> (i32, i32) {
    %c0_i32 = arith.constant 0 : i32
    %c0_i32_0 = arith.constant 0 : i32
    %c0_i32_1 = arith.constant 0 : i32
    return %c0_i32, %c0_i32_0 : i32, i32
  }
  func.func @transform_5(%arg0: i32, %arg1: i32) -> (i32, i32) {
    %c0_i32 = arith.constant 0 : i32
    %c0_i32_0 = arith.constant 0 : i32
    %c0_i32_1 = arith.constant 0 : i32
    return %c0_i32, %c0_i32_0 : i32, i32
  }
  func.func @transform_6(%arg0: i32, %arg1: i32) -> (i32, i32) {
    %c0_i32 = arith.constant 0 : i32
    %c0_i32_0 = arith.constant 0 : i32
    return %arg0, %c0_i32 : i32, i32
  }
}

module attributes {stable_mosaic.version = 11 : i64} {
  func.func @_output_kernel(%arg0: i32, %arg1: i32, %arg2: memref<8x128xf32, #tpu.memory_space<vmem>>, %arg3: memref<128x32xbf16, #tpu.memory_space<vmem>>, %arg4: memref<1x32xf32, #tpu.memory_space<vmem>>, %arg5: memref<8x32xf32, #tpu.memory_space<vmem>>, %arg6: memref<1x32xf32, #tpu.memory_space<vmem>>, %arg7: memref<1x32xf32, #tpu.memory_space<vmem>>, %arg8: memref<8x32xf32, #tpu.memory_space<vmem>>, %arg9: memref<8x32xf32, #tpu.memory_space<vmem>>) attributes {dimension_semantics = [#tpu.dimension_semantics<parallel>, #tpu.dimension_semantics<arbitrary>], iteration_bounds = array<i64: 2, 1>, scalar_prefetch = 0 : i64, scratch_operands = 1 : i64, tpu.core_type = #tpu.core_type<tc>, window_params = [{transform_indices = @transform_0, window_bounds = array<i64: 8, 128>}, {pipeline_mode = #tpu.pipeline_mode<synchronous>, transform_indices = @transform_1, window_bounds = array<i64: 128, 32>}, {pipeline_mode = #tpu.pipeline_mode<synchronous>, transform_indices = @transform_2, window_bounds = array<i64: 1, 32>}, {transform_indices = @transform_3, window_bounds = array<i64: 8, 32>}, {pipeline_mode = #tpu.pipeline_mode<synchronous>, transform_indices = @transform_4, window_bounds = array<i64: 1, 32>}, {pipeline_mode = #tpu.pipeline_mode<synchronous>, transform_indices = @transform_5, window_bounds = array<i64: 1, 32>}, {transform_indices = @transform_6, window_bounds = array<i64: 8, 32>}]} {
    %c0_i32 = arith.constant 0 : i32
    %0 = arith.cmpi eq, %arg1, %c0_i32 : i32
    %1 = arith.extui %0 : i1 to i32
    %c0_i32_0 = arith.constant 0 : i32
    %2 = arith.cmpi ne, %1, %c0_i32_0 : i32
    scf.if %2 {
      %cst_10 = arith.constant 0.000000e+00 : f32
      %13 = vector.broadcast %cst_10 : f32 to vector<8x32xf32>
      %c0_11 = arith.constant 0 : index
      %c0_12 = arith.constant 0 : index
      %14 = vector.load %arg9[%c0_11, %c0_12] : memref<8x32xf32, #tpu.memory_space<vmem>>, vector<8x32xf32>
      tpu.vector_store %arg9[%c0_11, %c0_12], %13 {strides = array<i32>} : memref<8x32xf32, #tpu.memory_space<vmem>>, vector<8x32xf32>,
    } else {
    }
    %c0 = arith.constant 0 : index
    %c0_1 = arith.constant 0 : index
    %3 = vector.load %arg9[%c0, %c0_1] : memref<8x32xf32, #tpu.memory_space<vmem>>, vector<8x32xf32>
    %c0_2 = arith.constant 0 : index
    %c0_3 = arith.constant 0 : index
    %4 = vector.load %arg2[%c0_2, %c0_3] : memref<8x128xf32, #tpu.memory_space<vmem>>, vector<8x128xf32>
    %5 = arith.truncf %4 : vector<8x128xf32> to vector<8x128xbf16>
    %c0_4 = arith.constant 0 : index
    %c0_5 = arith.constant 0 : index
    %6 = vector.load %arg3[%c0_4, %c0_5] : memref<128x32xbf16, #tpu.memory_space<vmem>>, vector<128x32xbf16>
    %cst = arith.constant dense<0.000000e+00> : vector<8x32xf32>
    %7 = tpu.matmul %5, %6, %cst {dimension_numbers = #tpu.dot_dimension_numbers<[1], [0], [0], [1], [0, 0, 1, 1], [], []>} : vector<8x128xbf16>, vector<128x32xbf16>, vector<8x32xf32> -> vector<8x32xf32>
    %8 = arith.addf %3, %7 : vector<8x32xf32>
    %c0_6 = arith.constant 0 : index
    %c0_7 = arith.constant 0 : index
    %9 = vector.load %arg9[%c0_6, %c0_7] : memref<8x32xf32, #tpu.memory_space<vmem>>, vector<8x32xf32>
    tpu.vector_store %arg9[%c0_6, %c0_7], %8 {strides = array<i32>} : memref<8x32xf32, #tpu.memory_space<vmem>>, vector<8x32xf32>,
    %c0_i32_8 = arith.constant 0 : i32
    %10 = arith.cmpi eq, %arg1, %c0_i32_8 : i32
    %11 = arith.extui %10 : i1 to i32
    %c0_i32_9 = arith.constant 0 : i32
    %12 = arith.cmpi ne, %11, %c0_i32_9 : i32
    scf.if %12 {
      %c0_10 = arith.constant 0 : index
      %c0_11 = arith.constant 0 : index
      %13 = vector.load %arg9[%c0_10, %c0_11] : memref<8x32xf32, #tpu.memory_space<vmem>>, vector<8x32xf32>
      %c0_12 = arith.constant 0 : index
      %c0_13 = arith.constant 0 : index
      %14 = vector.load %arg4[%c0_12, %c0_13] : memref<1x32xf32, #tpu.memory_space<vmem>>, vector<1x32xf32>
      %15 = vector.broadcast %14 : vector<1x32xf32> to vector<8x32xf32>
      %16 = arith.addf %13, %15 : vector<8x32xf32>
      %c0_14 = arith.constant 0 : index
      %c0_15 = arith.constant 0 : index
      %17 = vector.load %arg5[%c0_14, %c0_15] : memref<8x32xf32, #tpu.memory_space<vmem>>, vector<8x32xf32>
      %18 = arith.addf %16, %17 : vector<8x32xf32>
      %cst_16 = arith.constant dense<0.000000e+00> : vector<8xf32>
      %19 = vector.multi_reduction <add>, %18, %cst_16 [1] : vector<8x32xf32> to vector<8xf32>
      %20 = vector.shape_cast %19 : vector<8xf32> to vector<8x1xf32>
      %cst_17 = arith.constant 3.125000e-02 : f32
      %21 = vector.broadcast %cst_17 : f32 to vector<8x1xf32>
      %22 = arith.mulf %20, %21 : vector<8x1xf32>
      %23 = vector.broadcast %22 : vector<8x1xf32> to vector<8x32xf32>
      %24 = arith.subf %18, %23 : vector<8x32xf32>
      %25 = arith.mulf %24, %24 : vector<8x32xf32>
      %cst_18 = arith.constant dense<0.000000e+00> : vector<8xf32>
      %26 = vector.multi_reduction <add>, %25, %cst_18 [1] : vector<8x32xf32> to vector<8xf32>
      %27 = vector.shape_cast %26 : vector<8xf32> to vector<8x1xf32>
      %cst_19 = arith.constant 3.125000e-02 : f32
      %28 = vector.broadcast %cst_19 : f32 to vector<8x1xf32>
      %29 = arith.mulf %27, %28 : vector<8x1xf32>
      %cst_20 = arith.constant 9.99999996E-13 : f32
      %30 = vector.broadcast %cst_20 : f32 to vector<8x1xf32>
      %31 = arith.addf %29, %30 : vector<8x1xf32>
      %32 = math.rsqrt %31 : vector<8x1xf32>
      %33 = vector.broadcast %32 : vector<8x1xf32> to vector<8x32xf32>
      %34 = arith.mulf %24, %33 : vector<8x32xf32>
      %c0_21 = arith.constant 0 : index
      %c0_22 = arith.constant 0 : index
      %35 = vector.load %arg6[%c0_21, %c0_22] : memref<1x32xf32, #tpu.memory_space<vmem>>, vector<1x32xf32>
      %36 = vector.broadcast %35 : vector<1x32xf32> to vector<8x32xf32>
      %37 = arith.mulf %34, %36 : vector<8x32xf32>
      %c0_23 = arith.constant 0 : index
      %c0_24 = arith.constant 0 : index
      %38 = vector.load %arg7[%c0_23, %c0_24] : memref<1x32xf32, #tpu.memory_space<vmem>>, vector<1x32xf32>
      %39 = vector.broadcast %38 : vector<1x32xf32> to vector<8x32xf32>
      %40 = arith.addf %37, %39 : vector<8x32xf32>
      %c0_25 = arith.constant 0 : index
      %c0_26 = arith.constant 0 : index
      %41 = vector.load %arg8[%c0_25, %c0_26] : memref<8x32xf32, #tpu.memory_space<vmem>>, vector<8x32xf32>
      tpu.vector_store %arg8[%c0_25, %c0_26], %40 {strides = array<i32>} : memref<8x32xf32, #tpu.memory_space<vmem>>, vector<8x32xf32>,
    } else {
    }
    return
  }
  func.func @transform_0(%arg0: i32, %arg1: i32) -> (i32, i32) {
    %c0_i32 = arith.constant 0 : i32
    return %arg0, %arg1 : i32, i32
  }
  func.func @transform_1(%arg0: i32, %arg1: i32) -> (i32, i32) {
    %c0_i32 = arith.constant 0 : i32
    %c0_i32_0 = arith.constant 0 : i32
    %c0_i32_1 = arith.constant 0 : i32
    return %c0_i32, %c0_i32_0 : i32, i32
  }
  func.func @transform_2(%arg0: i32, %arg1: i32) -> (i32, i32) {
    %c0_i32 = arith.constant 0 : i32
    %c0_i32_0 = arith.constant 0 : i32
    %c0_i32_1 = arith.constant 0 : i32
    return %c0_i32, %c0_i32_0 : i32, i32
  }
  func.func @transform_3(%arg0: i32, %arg1: i32) -> (i32, i32) {
    %c0_i32 = arith.constant 0 : i32
    %c0_i32_0 = arith.constant 0 : i32
    return %arg0, %c0_i32 : i32, i32
  }
  func.func @transform_4(%arg0: i32, %arg1: i32) -> (i32, i32) {
    %c0_i32 = arith.constant 0 : i32
    %c0_i32_0 = arith.constant 0 : i32
    %c0_i32_1 = arith.constant 0 : i32
    return %c0_i32, %c0_i32_0 : i32, i32
  }
  func.func @transform_5(%arg0: i32, %arg1: i32) -> (i32, i32) {
    %c0_i32 = arith.constant 0 : i32
    %c0_i32_0 = arith.constant 0 : i32
    %c0_i32_1 = arith.constant 0 : i32
    return %c0_i32, %c0_i32_0 : i32, i32
  }
  func.func @transform_6(%arg0: i32, %arg1: i32) -> (i32, i32) {
    %c0_i32 = arith.constant 0 : i32
    %c0_i32_0 = arith.constant 0 : i32
    return %arg0, %c0_i32 : i32, i32
  }
}

</mosaic_0001>

<llo_original>
// kernel: tpu_custom_call.1
$region0: #{tpu_custom_call.1}
  #allocation0 [shape = 'u32[]', space=smem, size = 0x4, offset = 0x4, fixed_abs, tag = 'smem constant byte address 0x4 - core index']
  #allocation1 [shape = 'u32[72,128]{1,0:T(1,128)}', space=vmem, size = 0x9000, scoped, tag = 'internal scratch']
  #allocation2 [shape = 'f32[8,32]{1,0:T(8,128)}', space=vmem, size = 0x1000, scoped, tag = 'scratch operand']
  %s0 = inlined_call_operand.vmem [shape: f32[16,128], index: 0, kind: input, shape index: {}]
  %s1 = inlined_call_operand.vmem [shape: bf16[128,32], index: 1, kind: input, shape index: {}]
  %s2 = inlined_call_operand.vmem [shape: f32[1,32], index: 2, kind: input, shape index: {}]
  %s3 = inlined_call_operand.vmem [shape: f32[16,32], index: 3, kind: input, shape index: {}]
  %s4 = inlined_call_operand.vmem [shape: f32[1,32], index: 4, kind: input, shape index: {}]
  %s5 = inlined_call_operand.vmem [shape: f32[1,32], index: 5, kind: input, shape index: {}]
  %s6 = inlined_call_operand.hbm [shape: f32[16,32], index: 6, kind: output, shape index: {}]
  %s7 = sld [smem:[#allocation0]]
  $region65: #{tpu_custom_call.1} parent=0
    _
  %s9 = ssub.s32 1, %s7
  %s10 = scalar_select 0, %s9, %s7
  $region1: #{tpu_custom_call.1} parent=0
    #allocation3 [shape = 'u8[8192]{0}', space=vmem, size = 0x2000, scoped, tag = 'output window, operand 0']
    #allocation4 [shape = 's32[2]{0}', space=sflag, size = 0x8, scoped, tag = 'scoped memory for tpu_custom_call.1']
    %11 = vsyncpa [#allocation4], 0
    %s12 = scalar_lea.sflag [#allocation4], 1
    %13 = vsyncpa %s12, 0
    loop: start=0, step=1, limit=4
    $region2: #{tpu_custom_call.1} parent=1 // loop_pre_header
      _
    $region3: #{tpu_custom_call.1} parent=1 // loop_header
      %s15 = sphi 0, %s19
      %p16 = scmp.ge.s32.totalorder %s15, 4
      %s22 = sphi 0, %s34
      %s23 = sphi 0, %s30
      %s24 = sphi 0, %s22
      %s25 = sphi 0, %s23
      %s26 = sphi 0, %s24
      %s27 = sphi 0, %s25
      %s39 = sphi 0, %s41
      %s42 = sphi 0, %s39
      %s43 = sphi 0, %s42
      %s59 = sphi 0, %s43
      %s63 = sphi 0, %s63
      %s65 = sphi 0, %s63
      %s66 = sphi 0, %s65
      %s80 = sphi 0, %s66
      %s84 = sphi 0, %s84
      %s86 = sphi 0, %s84
      %s87 = sphi 0, %s86
      %s101 = sphi 0, %s87
      %s107 = sphi 0, %s109
      %s110 = sphi 0, %s107
      %s111 = sphi 0, %s110
      %s127 = sphi 0, %s111
      %s131 = sphi 0, %s131
      %s133 = sphi 0, %s131
      %s134 = sphi 0, %s133
      %s148 = sphi 0, %s134
      %s152 = sphi 0, %s152
      %s154 = sphi 0, %s152
      %s155 = sphi 0, %s154
      %s169 = sphi 0, %s155
      %s175 = sphi 0, %s177
      %s178 = sphi 0, %s175
      %s179 = sphi 0, %s178
      %s195 = sphi 0, %s179
    $region4: #{tpu_custom_call.1} parent=1 // loop_header_branch
      %18 = sbr.rel (%p16) target = $region8
    $region5: #{tpu_custom_call.1} parent=1 // loop_body
      %s20 = ssub.s32 %s15, 1
      %s21 = ssub.s32 %s15, 2
      %s28 = sadd.s32 1, %s23
      %p29 = scmp.ge.s32.totalorder %s28, 1
      %s30 = scalar_select %p29, 0, %s28
      %s31 = sadd.s32 1, %s22
      %s32 = scalar_select %p29, %s31, %s22
      %p33 = scmp.ge.s32.totalorder %s32, 2
      %s34 = scalar_select %p33, 0, %s32
      %s35 = ssub.s32 %s22, %s34
      %s36 = ssub.s32 %s23, %s30
      %s37 = sor.u32 %s35, %s36
      %p38 = scmp.eq.s32.totalorder %s37, 0
      %s40 = sadd.s32 %s39, 1
      %s41 = scalar_select %p38, %s39, %s40
      %p44 = pneg %p38
      %p45 = scmp.eq.s32.totalorder %s15, 1
      %p46 = por %p44, %p45
      %p47 = scmp.ne.s32.totalorder %s39, %s42
      %p48 = scmp.eq.s32.totalorder %s15, 0
      %p49 = por %p47, %p48
      %p50 = scmp.ne.s32.totalorder %s39, %s42
      %p51 = scmp.eq.s32.totalorder %s20, 1
      %p52 = por %p50, %p51
      %p53 = scmp.ne.s32.totalorder %s42, %s43
      %p54 = scmp.eq.s32.totalorder %s20, 0
      %p55 = por %p53, %p54
      %p56 = scmp.ne.s32.totalorder %s42, %s43
      %p57 = scmp.eq.s32.totalorder %s21, 1
      %p58 = por %p56, %p57
      %p60 = scmp.ne.s32.totalorder %s43, %s59
      %p61 = scmp.eq.s32.totalorder %s21, 0
      %p62 = por %p60, %p61
      %s64 = sadd.s32 %s63, 1
      %p67 = scmp.eq.s32.totalorder %s15, 1
      %p68 = scmp.ne.s32.totalorder %s63, %s65
      %p69 = scmp.eq.s32.totalorder %s15, 0
      %p70 = por %p68, %p69
      %p71 = scmp.ne.s32.totalorder %s63, %s65
      %p72 = scmp.eq.s32.totalorder %s20, 1
      %p73 = por %p71, %p72
      %p74 = scmp.ne.s32.totalorder %s65, %s66
      %p75 = scmp.eq.s32.totalorder %s20, 0
      %p76 = por %p74, %p75
      %p77 = scmp.ne.s32.totalorder %s65, %s66
      %p78 = scmp.eq.s32.totalorder %s21, 1
      %p79 = por %p77, %p78
      %p81 = scmp.ne.s32.totalorder %s66, %s80
      %p82 = scmp.eq.s32.totalorder %s21, 0
      %p83 = por %p81, %p82
      %s85 = sadd.s32 %s84, 1
      %p88 = scmp.eq.s32.totalorder %s15, 1
      %p89 = scmp.ne.s32.totalorder %s84, %s86
      %p90 = scmp.eq.s32.totalorder %s15, 0
      %p91 = por %p89, %p90
      %p92 = scmp.ne.s32.totalorder %s84, %s86
      %p93 = scmp.eq.s32.totalorder %s20, 1
      %p94 = por %p92, %p93
      %p95 = scmp.ne.s32.totalorder %s86, %s87
      %p96 = scmp.eq.s32.totalorder %s20, 0
      %p97 = por %p95, %p96
      %p98 = scmp.ne.s32.totalorder %s86, %s87
      %p99 = scmp.eq.s32.totalorder %s21, 1
      %p100 = por %p98, %p99
      %p102 = scmp.ne.s32.totalorder %s87, %s101
      %p103 = scmp.eq.s32.totalorder %s21, 0
      %p104 = por %p102, %p103
      %s105 = ssub.s32 %s22, %s34
      %p106 = scmp.eq.s32.totalorder %s105, 0
      %s108 = sadd.s32 %s107, 1
      %s109 = scalar_select %p106, %s107, %s108
      %p112 = pneg %p106
      %p113 = scmp.eq.s32.totalorder %s15, 1
      %p114 = por %p112, %p113
      %p115 = scmp.ne.s32.totalorder %s107, %s110
      %p116 = scmp.eq.s32.totalorder %s15, 0
      %p117 = por %p115, %p116
      %p118 = scmp.ne.s32.totalorder %s107, %s110
      %p119 = scmp.eq.s32.totalorder %s20, 1
      %p120 = por %p118, %p119
      %p121 = scmp.ne.s32.totalorder %s110, %s111
      %p122 = scmp.eq.s32.totalorder %s20, 0
      %p123 = por %p121, %p122
      %p124 = scmp.ne.s32.totalorder %s110, %s111
      %p125 = scmp.eq.s32.totalorder %s21, 1
      %p126 = por %p124, %p125
      %p128 = scmp.ne.s32.totalorder %s111, %s127
      %p129 = scmp.eq.s32.totalorder %s21, 0
      %p130 = por %p128, %p129
      %s132 = sadd.s32 %s131, 1
      %p135 = scmp.eq.s32.totalorder %s15, 1
      %p136 = scmp.ne.s32.totalorder %s131, %s133
      %p137 = scmp.eq.s32.totalorder %s15, 0
      %p138 = por %p136, %p137
      %p139 = scmp.ne.s32.totalorder %s131, %s133
      %p140 = scmp.eq.s32.totalorder %s20, 1
      %p141 = por %p139, %p140
      %p142 = scmp.ne.s32.totalorder %s133, %s134
      %p143 = scmp.eq.s32.totalorder %s20, 0
      %p144 = por %p142, %p143
      %p145 = scmp.ne.s32.totalorder %s133, %s134
      %p146 = scmp.eq.s32.totalorder %s21, 1
      %p147 = por %p145, %p146
      %p149 = scmp.ne.s32.totalorder %s134, %s148
      %p150 = scmp.eq.s32.totalorder %s21, 0
      %p151 = por %p149, %p150
      %s153 = sadd.s32 %s152, 1
      %p156 = scmp.eq.s32.totalorder %s15, 1
      %p157 = scmp.ne.s32.totalorder %s152, %s154
      %p158 = scmp.eq.s32.totalorder %s15, 0
      %p159 = por %p157, %p158
      %p160 = scmp.ne.s32.totalorder %s152, %s154
      %p161 = scmp.eq.s32.totalorder %s20, 1
      %p162 = por %p160, %p161
      %p163 = scmp.ne.s32.totalorder %s154, %s155
      %p164 = scmp.eq.s32.totalorder %s20, 0
      %p165 = por %p163, %p164
      %p166 = scmp.ne.s32.totalorder %s154, %s155
      %p167 = scmp.eq.s32.totalorder %s21, 1
      %p168 = por %p166, %p167
      %p170 = scmp.ne.s32.totalorder %s155, %s169
      %p171 = scmp.eq.s32.totalorder %s21, 0
      %p172 = por %p170, %p171
      %s173 = ssub.s32 %s22, %s34
      %p174 = scmp.eq.s32.totalorder %s173, 0
      %s176 = sadd.s32 %s175, 1
      %s177 = scalar_select %p174, %s175, %s176
      %p180 = pneg %p174
      %p181 = scmp.eq.s32.totalorder %s15, 1
      %p182 = por %p180, %p181
      %p183 = scmp.ne.s32.totalorder %s175, %s178
      %p184 = scmp.eq.s32.totalorder %s15, 0
      %p185 = por %p183, %p184
      %p186 = scmp.ne.s32.totalorder %s175, %s178
      %p187 = scmp.eq.s32.totalorder %s20, 1
      %p188 = por %p186, %p187
      %p189 = scmp.ne.s32.totalorder %s178, %s179
      %p190 = scmp.eq.s32.totalorder %s20, 0
      %p191 = por %p189, %p190
      %p192 = scmp.ne.s32.totalorder %s178, %s179
      %p193 = scmp.eq.s32.totalorder %s21, 1
      %p194 = por %p192, %p193
      %p196 = scmp.ne.s32.totalorder %s179, %s195
      %p197 = scmp.eq.s32.totalorder %s21, 0
      %p198 = por %p196, %p197
      %p199 = scmp.le.s32.totalorder 1, %s15
      %p200 = scmp.lt.s32.totalorder %s15, 3
      %p201 = pnand %p199, %p200
      %p202 = pneg %p201
      // Predicated region
      $region9: #{tpu_custom_call.1} parent=5 // pred_check
        _
      $region10: #{tpu_custom_call.1} parent=5 // pred_check_branch
        %204 = sbr.rel (%p201) target = $region12
      $region11: #{tpu_custom_call.1} parent=5 // pred_region
        %s205 = ssub.s32 %s15, 1
        // Predicated region
        $region13: #{tpu_custom_call.1} parent=11 // pred_check
          %p206 = pneg %p76
        $region14: #{tpu_custom_call.1} parent=11 // pred_check_branch
          %208 = sbr.rel (%p206) target = $region16
        $region15: #{tpu_custom_call.1} parent=11 // pred_region
          _
        $region16: #{tpu_custom_call.1} parent=11 // pred_fallthru
          _
        // Predicated region
        $region17: #{tpu_custom_call.1} parent=11 // pred_check
          %p209 = pneg %p97
        $region18: #{tpu_custom_call.1} parent=11 // pred_check_branch
          %211 = sbr.rel (%p209) target = $region20
        $region19: #{tpu_custom_call.1} parent=11 // pred_region
          _
        $region20: #{tpu_custom_call.1} parent=11 // pred_fallthru
          _
        // Predicated region
        $region21: #{tpu_custom_call.1} parent=11 // pred_check
          %p212 = pneg %p144
        $region22: #{tpu_custom_call.1} parent=11 // pred_check_branch
          %214 = sbr.rel (%p212) target = $region24
        $region23: #{tpu_custom_call.1} parent=11 // pred_region
          _
        $region24: #{tpu_custom_call.1} parent=11 // pred_fallthru
          _
        // Predicated region
        $region25: #{tpu_custom_call.1} parent=11 // pred_check
          %p215 = pneg %p165
        $region26: #{tpu_custom_call.1} parent=11 // pred_check_branch
          %217 = sbr.rel (%p215) target = $region28
        $region27: #{tpu_custom_call.1} parent=11 // pred_region
          _
        $region28: #{tpu_custom_call.1} parent=11 // pred_fallthru
          _
      $region12: #{tpu_custom_call.1} parent=5 // pred_fallthru
        _
      %p218 = scmp.lt.s32.totalorder %s15, 2
      // Predicated region
      $region29: #{tpu_custom_call.1} parent=5 // pred_check
        %p219 = pneg %p218
      $region30: #{tpu_custom_call.1} parent=5 // pred_check_branch
        %221 = sbr.rel (%p219) target = $region32
      $region31: #{tpu_custom_call.1} parent=5 // pred_region
        // Predicated region
        $region33: #{tpu_custom_call.1} parent=31 // pred_check
          %p222 = pneg %p49
        $region34: #{tpu_custom_call.1} parent=31 // pred_check_branch
          %224 = sbr.rel (%p222) target = $region36
        $region35: #{tpu_custom_call.1} parent=31 // pred_region
          %p225 = scmp.lt.s32.totalorder %s22, 1
          %s226 = scalar_select %p225, %s22, 1
          %p227 = scmp.lt.s32.totalorder %s23, 0
          %s228 = scalar_select %p227, %s23, 0
          %s229 = sadd.s32 %s228, %s226
          %s230 = smul.addr %s229, 8
          %s231 = scalar_lea.vmem %s0, %s230
        $region36: #{tpu_custom_call.1} parent=31 // pred_fallthru
          _
        // Predicated region
        $region37: #{tpu_custom_call.1} parent=31 // pred_check
          %p232 = pneg %p117
        $region38: #{tpu_custom_call.1} parent=31 // pred_check_branch
          %234 = sbr.rel (%p232) target = $region40
        $region39: #{tpu_custom_call.1} parent=31 // pred_region
          %p235 = scmp.lt.s32.totalorder %s22, 1
          %s236 = scalar_select %p235, %s22, 1
          %s237 = smul.addr %s236, 8
          %s238 = scalar_lea.vmem %s3, %s237
        $region40: #{tpu_custom_call.1} parent=31 // pred_fallthru
          _
      $region32: #{tpu_custom_call.1} parent=5 // pred_fallthru
        _
      %p239 = scmp.le.s32.totalorder 1, %s15
      %p240 = scmp.lt.s32.totalorder %s15, 3
      %p241 = pnand %p239, %p240
      %p242 = pneg %p241
      // Predicated region
      $region41: #{tpu_custom_call.1} parent=5 // pred_check
        _
      $region42: #{tpu_custom_call.1} parent=5 // pred_check_branch
        %244 = sbr.rel (%p241) target = $region44
      $region43: #{tpu_custom_call.1} parent=5 // pred_region
        %s245 = ssub.s32 %s15, 1
        %p246 = scmp.lt.s32.totalorder %s24, 1
        %s247 = scalar_select %p246, %s24, 1
        %p248 = scmp.lt.s32.totalorder %s25, 0
        %s249 = scalar_select %p248, %s25, 0
        %s250 = sadd.s32 %s249, %s247
        %s251 = smul.addr %s250, 8
        %s252 = scalar_lea.vmem %s0, %s251
        %p253 = pneg %p55
        %p254 = pneg %p52
        %p255 = pneg %p76
        %p256 = pneg %p73
        %p257 = pneg %p97
        %p258 = pneg %p94
        %p259 = scmp.lt.s32.totalorder %s24, 1
        %s260 = scalar_select %p259, %s24, 1
        %s261 = smul.addr %s260, 8
        %s262 = scalar_lea.vmem %s3, %s261
        %p263 = pneg %p123
        %p264 = pneg %p120
        %p265 = pneg %p144
        %p266 = pneg %p141
        %p267 = pneg %p165
        %p268 = pneg %p162
        %p269 = pneg %p191
        %p270 = pneg %p188
        %s271 = sand.u32 %s178, 1
        %s272 = scalar_lea.sflag [#allocation4], %s271
        %s273 = sand.u32 %s178, 1
        %s274 = smul.addr %s273, 8
        %s275 = scalar_lea.vmem [#allocation3], %s274
        %p276 = scmp.lt.s32.totalorder %s24, 1
        %s277 = scalar_select %p276, %s24, 1
        %p278 = scmp.lt.s32.totalorder %s25, 0
        %s279 = scalar_select %p278, %s25, 0
        %s280 = sadd.s32 %s279, %s277
        %s281 = smul.addr %s280, 8
        %s282 = scalar_lea.vmem %s0, %s281
        %p283 = scmp.lt.s32.totalorder %s24, 1
        %s284 = scalar_select %p283, %s24, 1
        %s285 = smul.addr %s284, 8
        %s286 = scalar_lea.vmem %s3, %s285
        %p287 = scmp.eq.s32.totalorder %s25, 0
        // Predicated region
        $region45: #{tpu_custom_call.1} parent=43 // pred_check
          %p288 = pneg %p287
        $region46: #{tpu_custom_call.1} parent=43 // pred_check_branch
          %290 = sbr.rel (%p288) target = $region48
        $region47: #{tpu_custom_call.1} parent=43 // pred_region
          %vm291 = vcmask 261120
          %292 = vst.msk [vmem:[#allocation2] sm:$0xff] %vm291, 0.0
        $region48: #{tpu_custom_call.1} parent=43 // pred_fallthru
          _
        %v293 = vld [vmem:[#allocation2] sm:$0xff]
        %v294 = vld [vmem:[%s282] sm:$0xff]
        %v295 = vpack.c.bf16 %v294, %v294
        %v296 = vld [vmem:[%s1] sm:$0xf]
        %v297 = vld [vmem:[%s1 + $0x4] sm:$0xf]
        %v298 = vld [vmem:[%s1 + $0x8] sm:$0xf]
        %v299 = vld [vmem:[%s1 + $0xc] sm:$0xf]
        %v300 = vld [vmem:[%s1 + $0x10] sm:$0xf]
        %v301 = vld [vmem:[%s1 + $0x14] sm:$0xf]
        %v302 = vld [vmem:[%s1 + $0x18] sm:$0xf]
        %v303 = vld [vmem:[%s1 + $0x1c] sm:$0xf]
        %v304 = vld [vmem:[%s1 + $0x20] sm:$0xf]
        %v305 = vld [vmem:[%s1 + $0x24] sm:$0xf]
        %v306 = vld [vmem:[%s1 + $0x28] sm:$0xf]
        %v307 = vld [vmem:[%s1 + $0x2c] sm:$0xf]
        %v308 = vld [vmem:[%s1 + $0x30] sm:$0xf]
        %v309 = vld [vmem:[%s1 + $0x34] sm:$0xf]
        %v310 = vld [vmem:[%s1 + $0x38] sm:$0xf]
        %v311 = vld [vmem:[%s1 + $0x3c] sm:$0xf]
        %v328 = vunpack.c.l.b16 %v296
        %v329 = vunpack.c.l.b16 %v297
        %v330 = vunpack.c.l.b16 %v298
        %v331 = vunpack.c.l.b16 %v299
        %v332 = vunpack.c.l.b16 %v300
        %v333 = vunpack.c.l.b16 %v301
        %v334 = vunpack.c.l.b16 %v302
        %v335 = vunpack.c.l.b16 %v303
        %v336 = vunpack.c.l.b16 %v304
        %v337 = vunpack.c.l.b16 %v305
        %v338 = vunpack.c.l.b16 %v306
        %v339 = vunpack.c.l.b16 %v307
        %v340 = vunpack.c.l.b16 %v308
        %v341 = vunpack.c.l.b16 %v309
        %v342 = vunpack.c.l.b16 %v310
        %v343 = vunpack.c.l.b16 %v311
        %v344 = vpack.c.b16 %v329, %v328
        %v345 = vpack.c.b16 %v331, %v330
        %v346 = vpack.c.b16 %v333, %v332
        %v347 = vpack.c.b16 %v335, %v334
        %v348 = vpack.c.b16 %v337, %v336
        %v349 = vpack.c.b16 %v339, %v338
        %v350 = vpack.c.b16 %v341, %v340
        %v351 = vpack.c.b16 %v343, %v342
        %360 = vmatpush.bf16.msra.mxu0 %v351
        %361 = vmatpush.bf16.msra.mxu0 %v350
        %362 = vmatpush.bf16.msra.mxu0 %v349
        %363 = vmatpush.bf16.msra.mxu0 %v348
        %364 = vmatpush.bf16.msra.mxu0 %v347
        %365 = vmatpush.bf16.msra.mxu0 %v346
        %366 = vmatpush.bf16.msra.mxu0 %v345
        %367 = vmatpush.bf16.msra.mxu0 %v344
        %368 = vmatmul.bf16.gmra.mxu0 %v295
        %v369 = vpop.f32.mrf.mxu0
        %v370 = vadd.f32 0.0, %v369
        %v371 = vpop.f32.mrf.mxu0
        %372 = vdwg.mxu0
        %v373 = vadd.f32 %v293, %v370
        %vm374 = vcmask 261120
        %375 = vst.msk [vmem:[#allocation2] sm:$0xff] %vm374, %v373
        // Predicated region
        $region49: #{tpu_custom_call.1} parent=43 // pred_check
          %p376 = pneg %p287
        $region50: #{tpu_custom_call.1} parent=43 // pred_check_branch
          %378 = sbr.rel (%p376) target = $region52
        $region51: #{tpu_custom_call.1} parent=43 // pred_region
          %v379 = vld [vmem:[#allocation2] sm:$0xff]
          %v380 = vld [vmem:[%s2] sm:$0x1]
          %v382 = vperm.slane %v380, 0
          %v384 = vadd.f32 %v379, %v382
          %v385 = vld [vmem:[%s286] sm:$0xff]
          %v386 = vadd.f32 %v384, %v385
          %v387 = vsel %vm374, %v386, 0.0
          %388 = vadd.xlane.f32.xlu0 %v387
          %v389 = vpop.xlane.xlu0 %388
          %v390 = vmul.f32 %v389, 0.03125
          %v391 = vsub.f32 %v386, %v390
          %v392 = vmul.f32 %v391, %v391
          %v393 = vsel %vm374, %v392, 0.0
          %394 = vadd.xlane.f32.xlu0 %v393
          %v395 = vpop.xlane.xlu0 %394
          %v396 = vmul.f32 %v395, 0.03125
          %v397 = vadd.f32 %v396, 1e-12
          %v398 = vrsqrt.pop %v397
          %v399 = vmul.f32 %v398, %v397
          %v400 = vmul.f32 %v399, %v398
          %v401 = vmul.f32 0.5, %v400
          %v402 = vsub.f32 1.5, %v401
          %v403 = vmul.f32 %v398, %v402
          %vm404 = vweird.f32 %v397
          %vm405 = vweird.f32 %v398
          %vm406 = vmor %vm404, %vm405
          %v407 = vsel %vm406, %v398, %v403
          %v408 = vmul.f32 %v391, %v407
          %v409 = vld [vmem:[%s4] sm:$0x1]
          %v411 = vperm.slane %v409, 0
          %v413 = vmul.f32 %v408, %v411
          %v414 = vld [vmem:[%s5] sm:$0x1]
          %v416 = vperm.slane %v414, 0
          %v418 = vadd.f32 %v413, %v416
          %419 = vst.msk [vmem:[%s275] sm:$0xff] %vm374, %v418
        $region52: #{tpu_custom_call.1} parent=43 // pred_fallthru
          _
        %s420 = sand.u32 %s178, 1
        %s421 = scalar_lea.sflag [#allocation4], %s420
        %s422 = sand.u32 %s178, 1
        %s423 = smul.addr %s422, 8
        %s424 = scalar_lea.vmem [#allocation3], %s423
        // Predicated region
        $region53: #{tpu_custom_call.1} parent=43 // pred_check
          %p425 = pneg %p188
        $region54: #{tpu_custom_call.1} parent=43 // pred_check_branch
          %427 = sbr.rel (%p425) target = $region56
        $region55: #{tpu_custom_call.1} parent=43 // pred_region
          %429 = vsyncadd %s421, 0
          %s430 = smul.addr %s24, 8
          %s431 = scalar_lea.hbm %s6, %s430
          %s433 = sshll.u32 %s424, 4
          %s434 = int_to_ptr.vmem [resolvable:$true] %s433
          %s435 = sshll.u32 %s431, 4
          %s436 = int_to_ptr.hbm [resolvable:$true] %s435
          %438 = dma.vmem_to_hbm [thread:$0]  %s434, 128, %s436, %s421
        $region56: #{tpu_custom_call.1} parent=43 // pred_fallthru
          _
      $region44: #{tpu_custom_call.1} parent=5 // pred_fallthru
        _
      %p439 = scmp.le.s32.totalorder 2, %s15
      // Predicated region
      $region57: #{tpu_custom_call.1} parent=5 // pred_check
        %p440 = pneg %p439
      $region58: #{tpu_custom_call.1} parent=5 // pred_check_branch
        %442 = sbr.rel (%p440) target = $region60
      $region59: #{tpu_custom_call.1} parent=5 // pred_region
        %s443 = ssub.s32 %s15, 2
        // Predicated region
        $region61: #{tpu_custom_call.1} parent=59 // pred_check
          %p444 = pneg %p194
        $region62: #{tpu_custom_call.1} parent=59 // pred_check_branch
          %446 = sbr.rel (%p444) target = $region64
        $region63: #{tpu_custom_call.1} parent=59 // pred_region
          %s447 = sand.u32 %s179, 1
          %s448 = scalar_lea.sflag [#allocation4], %s447
          %s449 = sand.u32 %s179, 1
          %s450 = smul.addr %s449, 8
          %s451 = scalar_lea.vmem [#allocation3], %s450
          %453 = dma.done %s448, 128
        $region64: #{tpu_custom_call.1} parent=59 // pred_fallthru
          _
      $region60: #{tpu_custom_call.1} parent=5 // pred_fallthru
        _
    $region6: #{tpu_custom_call.1} parent=1 // loop_footer
      %s19 = sadd.s32 1, %s15
    $region7: #{tpu_custom_call.1} parent=1 // loop_footer_branch
      %14 = sbr.rel target = $region3
    $region8: #{tpu_custom_call.1} parent=1 // loop_exit
      _
    %454 = vsyncpa [#allocation4], 1
    %s455 = scalar_lea.sflag [#allocation4], 1
    %456 = vsyncpa %s455, 1

// kernel: tpu_custom_call.1
$region0: #{tpu_custom_call.1}
  #allocation0 [shape = 'u32[]', space=smem, size = 0x4, offset = 0x4, fixed_abs, tag = 'smem constant byte address 0x4 - core index']
  #allocation1 [shape = 'u32[72,128]{1,0:T(1,128)}', space=vmem, size = 0x9000, scoped, tag = 'internal scratch']
  #allocation2 [shape = 'f32[8,32]{1,0:T(8,128)}', space=vmem, size = 0x1000, scoped, tag = 'scratch operand']
  %s0 = inlined_call_operand.vmem [shape: f32[16,128], index: 0, kind: input, shape index: {}]
  %s1 = inlined_call_operand.vmem [shape: bf16[128,32], index: 1, kind: input, shape index: {}]
  %s2 = inlined_call_operand.vmem [shape: f32[1,32], index: 2, kind: input, shape index: {}]
  %s3 = inlined_call_operand.vmem [shape: f32[16,32], index: 3, kind: input, shape index: {}]
  %s4 = inlined_call_operand.vmem [shape: f32[1,32], index: 4, kind: input, shape index: {}]
  %s5 = inlined_call_operand.vmem [shape: f32[1,32], index: 5, kind: input, shape index: {}]
  %s6 = inlined_call_operand.hbm [shape: f32[16,32], index: 6, kind: output, shape index: {}]
  %s7 = sld [smem:[#allocation0]]
  $region65: #{tpu_custom_call.1} parent=0
    _
  %s9 = ssub.s32 1, %s7
  %s10 = scalar_select 0, %s9, %s7
  $region1: #{tpu_custom_call.1} parent=0
    #allocation3 [shape = 'u8[8192]{0}', space=vmem, size = 0x2000, scoped, tag = 'output window, operand 0']
    #allocation4 [shape = 's32[2]{0}', space=sflag, size = 0x8, scoped, tag = 'scoped memory for tpu_custom_call.1']
    %11 = vsyncpa [#allocation4], 0
    %s12 = scalar_lea.sflag [#allocation4], 1
    %13 = vsyncpa %s12, 0
    loop: start=0, step=1, limit=4
    $region2: #{tpu_custom_call.1} parent=1 // loop_pre_header
      _
    $region3: #{tpu_custom_call.1} parent=1 // loop_header
      %s15 = sphi 0, %s19
      %p16 = scmp.ge.s32.totalorder %s15, 4
      %s22 = sphi 0, %s34
      %s23 = sphi 0, %s30
      %s24 = sphi 0, %s22
      %s25 = sphi 0, %s23
      %s26 = sphi 0, %s24
      %s27 = sphi 0, %s25
      %s39 = sphi 0, %s41
      %s42 = sphi 0, %s39
      %s43 = sphi 0, %s42
      %s59 = sphi 0, %s43
      %s63 = sphi 0, %s63
      %s65 = sphi 0, %s63
      %s66 = sphi 0, %s65
      %s80 = sphi 0, %s66
      %s84 = sphi 0, %s84
      %s86 = sphi 0, %s84
      %s87 = sphi 0, %s86
      %s101 = sphi 0, %s87
      %s107 = sphi 0, %s109
      %s110 = sphi 0, %s107
      %s111 = sphi 0, %s110
      %s127 = sphi 0, %s111
      %s131 = sphi 0, %s131
      %s133 = sphi 0, %s131
      %s134 = sphi 0, %s133
      %s148 = sphi 0, %s134
      %s152 = sphi 0, %s152
      %s154 = sphi 0, %s152
      %s155 = sphi 0, %s154
      %s169 = sphi 0, %s155
      %s175 = sphi 0, %s177
      %s178 = sphi 0, %s175
      %s179 = sphi 0, %s178
      %s195 = sphi 0, %s179
    $region4: #{tpu_custom_call.1} parent=1 // loop_header_branch
      %18 = sbr.rel (%p16) target = $region8
    $region5: #{tpu_custom_call.1} parent=1 // loop_body
      %s20 = ssub.s32 %s15, 1
      %s21 = ssub.s32 %s15, 2
      %s28 = sadd.s32 1, %s23
      %p29 = scmp.ge.s32.totalorder %s28, 1
      %s30 = scalar_select %p29, 0, %s28
      %s31 = sadd.s32 1, %s22
      %s32 = scalar_select %p29, %s31, %s22
      %p33 = scmp.ge.s32.totalorder %s32, 2
      %s34 = scalar_select %p33, 0, %s32
      %s35 = ssub.s32 %s22, %s34
      %s36 = ssub.s32 %s23, %s30
      %s37 = sor.u32 %s35, %s36
      %p38 = scmp.eq.s32.totalorder %s37, 0
      %s40 = sadd.s32 %s39, 1
      %s41 = scalar_select %p38, %s39, %s40
      %p44 = pneg %p38
      %p45 = scmp.eq.s32.totalorder %s15, 1
      %p46 = por %p44, %p45
      %p47 = scmp.ne.s32.totalorder %s39, %s42
      %p48 = scmp.eq.s32.totalorder %s15, 0
      %p49 = por %p47, %p48
      %p50 = scmp.ne.s32.totalorder %s39, %s42
      %p51 = scmp.eq.s32.totalorder %s20, 1
      %p52 = por %p50, %p51
      %p53 = scmp.ne.s32.totalorder %s42, %s43
      %p54 = scmp.eq.s32.totalorder %s20, 0
      %p55 = por %p53, %p54
      %p56 = scmp.ne.s32.totalorder %s42, %s43
      %p57 = scmp.eq.s32.totalorder %s21, 1
      %p58 = por %p56, %p57
      %p60 = scmp.ne.s32.totalorder %s43, %s59
      %p61 = scmp.eq.s32.totalorder %s21, 0
      %p62 = por %p60, %p61
      %s64 = sadd.s32 %s63, 1
      %p67 = scmp.eq.s32.totalorder %s15, 1
      %p68 = scmp.ne.s32.totalorder %s63, %s65
      %p69 = scmp.eq.s32.totalorder %s15, 0
      %p70 = por %p68, %p69
      %p71 = scmp.ne.s32.totalorder %s63, %s65
      %p72 = scmp.eq.s32.totalorder %s20, 1
      %p73 = por %p71, %p72
      %p74 = scmp.ne.s32.totalorder %s65, %s66
      %p75 = scmp.eq.s32.totalorder %s20, 0
      %p76 = por %p74, %p75
      %p77 = scmp.ne.s32.totalorder %s65, %s66
      %p78 = scmp.eq.s32.totalorder %s21, 1
      %p79 = por %p77, %p78
      %p81 = scmp.ne.s32.totalorder %s66, %s80
      %p82 = scmp.eq.s32.totalorder %s21, 0
      %p83 = por %p81, %p82
      %s85 = sadd.s32 %s84, 1
      %p88 = scmp.eq.s32.totalorder %s15, 1
      %p89 = scmp.ne.s32.totalorder %s84, %s86
      %p90 = scmp.eq.s32.totalorder %s15, 0
      %p91 = por %p89, %p90
      %p92 = scmp.ne.s32.totalorder %s84, %s86
      %p93 = scmp.eq.s32.totalorder %s20, 1
      %p94 = por %p92, %p93
      %p95 = scmp.ne.s32.totalorder %s86, %s87
      %p96 = scmp.eq.s32.totalorder %s20, 0
      %p97 = por %p95, %p96
      %p98 = scmp.ne.s32.totalorder %s86, %s87
      %p99 = scmp.eq.s32.totalorder %s21, 1
      %p100 = por %p98, %p99
      %p102 = scmp.ne.s32.totalorder %s87, %s101
      %p103 = scmp.eq.s32.totalorder %s21, 0
      %p104 = por %p102, %p103
      %s105 = ssub.s32 %s22, %s34
      %p106 = scmp.eq.s32.totalorder %s105, 0
      %s108 = sadd.s32 %s107, 1
      %s109 = scalar_select %p106, %s107, %s108
      %p112 = pneg %p106
      %p113 = scmp.eq.s32.totalorder %s15, 1
      %p114 = por %p112, %p113
      %p115 = scmp.ne.s32.totalorder %s107, %s110
      %p116 = scmp.eq.s32.totalorder %s15, 0
      %p117 = por %p115, %p116
      %p118 = scmp.ne.s32.totalorder %s107, %s110
      %p119 = scmp.eq.s32.totalorder %s20, 1
      %p120 = por %p118, %p119
      %p121 = scmp.ne.s32.totalorder %s110, %s111
      %p122 = scmp.eq.s32.totalorder %s20, 0
      %p123 = por %p121, %p122
      %p124 = scmp.ne.s32.totalorder %s110, %s111
      %p125 = scmp.eq.s32.totalorder %s21, 1
      %p126 = por %p124, %p125
      %p128 = scmp.ne.s32.totalorder %s111, %s127
      %p129 = scmp.eq.s32.totalorder %s21, 0
      %p130 = por %p128, %p129
      %s132 = sadd.s32 %s131, 1
      %p135 = scmp.eq.s32.totalorder %s15, 1
      %p136 = scmp.ne.s32.totalorder %s131, %s133
      %p137 = scmp.eq.s32.totalorder %s15, 0
      %p138 = por %p136, %p137
      %p139 = scmp.ne.s32.totalorder %s131, %s133
      %p140 = scmp.eq.s32.totalorder %s20, 1
      %p141 = por %p139, %p140
      %p142 = scmp.ne.s32.totalorder %s133, %s134
      %p143 = scmp.eq.s32.totalorder %s20, 0
      %p144 = por %p142, %p143
      %p145 = scmp.ne.s32.totalorder %s133, %s134
      %p146 = scmp.eq.s32.totalorder %s21, 1
      %p147 = por %p145, %p146
      %p149 = scmp.ne.s32.totalorder %s134, %s148
      %p150 = scmp.eq.s32.totalorder %s21, 0
      %p151 = por %p149, %p150
      %s153 = sadd.s32 %s152, 1
      %p156 = scmp.eq.s32.totalorder %s15, 1
      %p157 = scmp.ne.s32.totalorder %s152, %s154
      %p158 = scmp.eq.s32.totalorder %s15, 0
      %p159 = por %p157, %p158
      %p160 = scmp.ne.s32.totalorder %s152, %s154
      %p161 = scmp.eq.s32.totalorder %s20, 1
      %p162 = por %p160, %p161
      %p163 = scmp.ne.s32.totalorder %s154, %s155
      %p164 = scmp.eq.s32.totalorder %s20, 0
      %p165 = por %p163, %p164
      %p166 = scmp.ne.s32.totalorder %s154, %s155
      %p167 = scmp.eq.s32.totalorder %s21, 1
      %p168 = por %p166, %p167
      %p170 = scmp.ne.s32.totalorder %s155, %s169
      %p171 = scmp.eq.s32.totalorder %s21, 0
      %p172 = por %p170, %p171
      %s173 = ssub.s32 %s22, %s34
      %p174 = scmp.eq.s32.totalorder %s173, 0
      %s176 = sadd.s32 %s175, 1
      %s177 = scalar_select %p174, %s175, %s176
      %p180 = pneg %p174
      %p181 = scmp.eq.s32.totalorder %s15, 1
      %p182 = por %p180, %p181
      %p183 = scmp.ne.s32.totalorder %s175, %s178
      %p184 = scmp.eq.s32.totalorder %s15, 0
      %p185 = por %p183, %p184
      %p186 = scmp.ne.s32.totalorder %s175, %s178
      %p187 = scmp.eq.s32.totalorder %s20, 1
      %p188 = por %p186, %p187
      %p189 = scmp.ne.s32.totalorder %s178, %s179
      %p190 = scmp.eq.s32.totalorder %s20, 0
      %p191 = por %p189, %p190
      %p192 = scmp.ne.s32.totalorder %s178, %s179
      %p193 = scmp.eq.s32.totalorder %s21, 1
      %p194 = por %p192, %p193
      %p196 = scmp.ne.s32.totalorder %s179, %s195
      %p197 = scmp.eq.s32.totalorder %s21, 0
      %p198 = por %p196, %p197
      %p199 = scmp.le.s32.totalorder 1, %s15
      %p200 = scmp.lt.s32.totalorder %s15, 3
      %p201 = pnand %p199, %p200
      %p202 = pneg %p201
      // Predicated region
      $region9: #{tpu_custom_call.1} parent=5 // pred_check
        _
      $region10: #{tpu_custom_call.1} parent=5 // pred_check_branch
        %204 = sbr.rel (%p201) target = $region12
      $region11: #{tpu_custom_call.1} parent=5 // pred_region
        %s205 = ssub.s32 %s15, 1
        // Predicated region
        $region13: #{tpu_custom_call.1} parent=11 // pred_check
          %p206 = pneg %p76
        $region14: #{tpu_custom_call.1} parent=11 // pred_check_branch
          %208 = sbr.rel (%p206) target = $region16
        $region15: #{tpu_custom_call.1} parent=11 // pred_region
          _
        $region16: #{tpu_custom_call.1} parent=11 // pred_fallthru
          _
        // Predicated region
        $region17: #{tpu_custom_call.1} parent=11 // pred_check
          %p209 = pneg %p97
        $region18: #{tpu_custom_call.1} parent=11 // pred_check_branch
          %211 = sbr.rel (%p209) target = $region20
        $region19: #{tpu_custom_call.1} parent=11 // pred_region
          _
        $region20: #{tpu_custom_call.1} parent=11 // pred_fallthru
          _
        // Predicated region
        $region21: #{tpu_custom_call.1} parent=11 // pred_check
          %p212 = pneg %p144
        $region22: #{tpu_custom_call.1} parent=11 // pred_check_branch
          %214 = sbr.rel (%p212) target = $region24
        $region23: #{tpu_custom_call.1} parent=11 // pred_region
          _
        $region24: #{tpu_custom_call.1} parent=11 // pred_fallthru
          _
        // Predicated region
        $region25: #{tpu_custom_call.1} parent=11 // pred_check
          %p215 = pneg %p165
        $region26: #{tpu_custom_call.1} parent=11 // pred_check_branch
          %217 = sbr.rel (%p215) target = $region28
        $region27: #{tpu_custom_call.1} parent=11 // pred_region
          _
        $region28: #{tpu_custom_call.1} parent=11 // pred_fallthru
          _
      $region12: #{tpu_custom_call.1} parent=5 // pred_fallthru
        _
      %p218 = scmp.lt.s32.totalorder %s15, 2
      // Predicated region
      $region29: #{tpu_custom_call.1} parent=5 // pred_check
        %p219 = pneg %p218
      $region30: #{tpu_custom_call.1} parent=5 // pred_check_branch
        %221 = sbr.rel (%p219) target = $region32
      $region31: #{tpu_custom_call.1} parent=5 // pred_region
        // Predicated region
        $region33: #{tpu_custom_call.1} parent=31 // pred_check
          %p222 = pneg %p49
        $region34: #{tpu_custom_call.1} parent=31 // pred_check_branch
          %224 = sbr.rel (%p222) target = $region36
        $region35: #{tpu_custom_call.1} parent=31 // pred_region
          %p225 = scmp.lt.s32.totalorder %s22, 1
          %s226 = scalar_select %p225, %s22, 1
          %p227 = scmp.lt.s32.totalorder %s23, 0
          %s228 = scalar_select %p227, %s23, 0
          %s229 = sadd.s32 %s228, %s226
          %s230 = smul.addr %s229, 8
          %s231 = scalar_lea.vmem %s0, %s230
        $region36: #{tpu_custom_call.1} parent=31 // pred_fallthru
          _
        // Predicated region
        $region37: #{tpu_custom_call.1} parent=31 // pred_check
          %p232 = pneg %p117
        $region38: #{tpu_custom_call.1} parent=31 // pred_check_branch
          %234 = sbr.rel (%p232) target = $region40
        $region39: #{tpu_custom_call.1} parent=31 // pred_region
          %p235 = scmp.lt.s32.totalorder %s22, 1
          %s236 = scalar_select %p235, %s22, 1
          %s237 = smul.addr %s236, 8
          %s238 = scalar_lea.vmem %s3, %s237
        $region40: #{tpu_custom_call.1} parent=31 // pred_fallthru
          _
      $region32: #{tpu_custom_call.1} parent=5 // pred_fallthru
        _
      %p239 = scmp.le.s32.totalorder 1, %s15
      %p240 = scmp.lt.s32.totalorder %s15, 3
      %p241 = pnand %p239, %p240
      %p242 = pneg %p241
      // Predicated region
      $region41: #{tpu_custom_call.1} parent=5 // pred_check
        _
      $region42: #{tpu_custom_call.1} parent=5 // pred_check_branch
        %244 = sbr.rel (%p241) target = $region44
      $region43: #{tpu_custom_call.1} parent=5 // pred_region
        %s245 = ssub.s32 %s15, 1
        %p246 = scmp.lt.s32.totalorder %s24, 1
        %s247 = scalar_select %p246, %s24, 1
        %p248 = scmp.lt.s32.totalorder %s25, 0
        %s249 = scalar_select %p248, %s25, 0
        %s250 = sadd.s32 %s249, %s247
        %s251 = smul.addr %s250, 8
        %s252 = scalar_lea.vmem %s0, %s251
        %p253 = pneg %p55
        %p254 = pneg %p52
        %p255 = pneg %p76
        %p256 = pneg %p73
        %p257 = pneg %p97
        %p258 = pneg %p94
        %p259 = scmp.lt.s32.totalorder %s24, 1
        %s260 = scalar_select %p259, %s24, 1
        %s261 = smul.addr %s260, 8
        %s262 = scalar_lea.vmem %s3, %s261
        %p263 = pneg %p123
        %p264 = pneg %p120
        %p265 = pneg %p144
        %p266 = pneg %p141
        %p267 = pneg %p165
        %p268 = pneg %p162
        %p269 = pneg %p191
        %p270 = pneg %p188
        %s271 = sand.u32 %s178, 1
        %s272 = scalar_lea.sflag [#allocation4], %s271
        %s273 = sand.u32 %s178, 1
        %s274 = smul.addr %s273, 8
        %s275 = scalar_lea.vmem [#allocation3], %s274
        %p276 = scmp.lt.s32.totalorder %s24, 1
        %s277 = scalar_select %p276, %s24, 1
        %p278 = scmp.lt.s32.totalorder %s25, 0
        %s279 = scalar_select %p278, %s25, 0
        %s280 = sadd.s32 %s279, %s277
        %s281 = smul.addr %s280, 8
        %s282 = scalar_lea.vmem %s0, %s281
        %p283 = scmp.lt.s32.totalorder %s24, 1
        %s284 = scalar_select %p283, %s24, 1
        %s285 = smul.addr %s284, 8
        %s286 = scalar_lea.vmem %s3, %s285
        %p287 = scmp.eq.s32.totalorder %s25, 0
        // Predicated region
        $region45: #{tpu_custom_call.1} parent=43 // pred_check
          %p288 = pneg %p287
        $region46: #{tpu_custom_call.1} parent=43 // pred_check_branch
          %290 = sbr.rel (%p288) target = $region48
        $region47: #{tpu_custom_call.1} parent=43 // pred_region
          %vm291 = vcmask 261120
          %292 = vst.msk [vmem:[#allocation2] sm:$0xff] %vm291, 0.0
        $region48: #{tpu_custom_call.1} parent=43 // pred_fallthru
          _
        %v293 = vld [vmem:[#allocation2] sm:$0xff]
        %v294 = vld [vmem:[%s282] sm:$0xff]
        %v295 = vpack.c.bf16 %v294, %v294
        %v296 = vld [vmem:[%s1] sm:$0xf]
        %v297 = vld [vmem:[%s1 + $0x4] sm:$0xf]
        %v298 = vld [vmem:[%s1 + $0x8] sm:$0xf]
        %v299 = vld [vmem:[%s1 + $0xc] sm:$0xf]
        %v300 = vld [vmem:[%s1 + $0x10] sm:$0xf]
        %v301 = vld [vmem:[%s1 + $0x14] sm:$0xf]
        %v302 = vld [vmem:[%s1 + $0x18] sm:$0xf]
        %v303 = vld [vmem:[%s1 + $0x1c] sm:$0xf]
        %v304 = vld [vmem:[%s1 + $0x20] sm:$0xf]
        %v305 = vld [vmem:[%s1 + $0x24] sm:$0xf]
        %v306 = vld [vmem:[%s1 + $0x28] sm:$0xf]
        %v307 = vld [vmem:[%s1 + $0x2c] sm:$0xf]
        %v308 = vld [vmem:[%s1 + $0x30] sm:$0xf]
        %v309 = vld [vmem:[%s1 + $0x34] sm:$0xf]
        %v310 = vld [vmem:[%s1 + $0x38] sm:$0xf]
        %v311 = vld [vmem:[%s1 + $0x3c] sm:$0xf]
        %v328 = vunpack.c.l.b16 %v296
        %v329 = vunpack.c.l.b16 %v297
        %v330 = vunpack.c.l.b16 %v298
        %v331 = vunpack.c.l.b16 %v299
        %v332 = vunpack.c.l.b16 %v300
        %v333 = vunpack.c.l.b16 %v301
        %v334 = vunpack.c.l.b16 %v302
        %v335 = vunpack.c.l.b16 %v303
        %v336 = vunpack.c.l.b16 %v304
        %v337 = vunpack.c.l.b16 %v305
        %v338 = vunpack.c.l.b16 %v306
        %v339 = vunpack.c.l.b16 %v307
        %v340 = vunpack.c.l.b16 %v308
        %v341 = vunpack.c.l.b16 %v309
        %v342 = vunpack.c.l.b16 %v310
        %v343 = vunpack.c.l.b16 %v311
        %v344 = vpack.c.b16 %v329, %v328
        %v345 = vpack.c.b16 %v331, %v330
        %v346 = vpack.c.b16 %v333, %v332
        %v347 = vpack.c.b16 %v335, %v334
        %v348 = vpack.c.b16 %v337, %v336
        %v349 = vpack.c.b16 %v339, %v338
        %v350 = vpack.c.b16 %v341, %v340
        %v351 = vpack.c.b16 %v343, %v342
        %360 = vmatpush.bf16.msra.mxu0 %v351
        %361 = vmatpush.bf16.msra.mxu0 %v350
        %362 = vmatpush.bf16.msra.mxu0 %v349
        %363 = vmatpush.bf16.msra.mxu0 %v348
        %364 = vmatpush.bf16.msra.mxu0 %v347
        %365 = vmatpush.bf16.msra.mxu0 %v346
        %366 = vmatpush.bf16.msra.mxu0 %v345
        %367 = vmatpush.bf16.msra.mxu0 %v344
        %368 = vmatmul.bf16.gmra.mxu0 %v295
        %v369 = vpop.f32.mrf.mxu0
        %v370 = vadd.f32 0.0, %v369
        %v371 = vpop.f32.mrf.mxu0
        %372 = vdwg.mxu0
        %v373 = vadd.f32 %v293, %v370
        %vm374 = vcmask 261120
        %375 = vst.msk [vmem:[#allocation2] sm:$0xff] %vm374, %v373
        // Predicated region
        $region49: #{tpu_custom_call.1} parent=43 // pred_check
          %p376 = pneg %p287
        $region50: #{tpu_custom_call.1} parent=43 // pred_check_branch
          %378 = sbr.rel (%p376) target = $region52
        $region51: #{tpu_custom_call.1} parent=43 // pred_region
          %v379 = vld [vmem:[#allocation2] sm:$0xff]
          %v380 = vld [vmem:[%s2] sm:$0x1]
          %v382 = vperm.slane %v380, 0
          %v384 = vadd.f32 %v379, %v382
          %v385 = vld [vmem:[%s286] sm:$0xff]
          %v386 = vadd.f32 %v384, %v385
          %v387 = vsel %vm374, %v386, 0.0
          %388 = vadd.xlane.f32.xlu0 %v387
          %v389 = vpop.xlane.xlu0 %388
          %v390 = vmul.f32 %v389, 0.03125
          %v391 = vsub.f32 %v386, %v390
          %v392 = vmul.f32 %v391, %v391
          %v393 = vsel %vm374, %v392, 0.0
          %394 = vadd.xlane.f32.xlu0 %v393
          %v395 = vpop.xlane.xlu0 %394
          %v396 = vmul.f32 %v395, 0.03125
          %v397 = vadd.f32 %v396, 1e-12
          %v398 = vrsqrt.pop %v397
          %v399 = vmul.f32 %v398, %v397
          %v400 = vmul.f32 %v399, %v398
          %v401 = vmul.f32 0.5, %v400
          %v402 = vsub.f32 1.5, %v401
          %v403 = vmul.f32 %v398, %v402
          %vm404 = vweird.f32 %v397
          %vm405 = vweird.f32 %v398
          %vm406 = vmor %vm404, %vm405
          %v407 = vsel %vm406, %v398, %v403
          %v408 = vmul.f32 %v391, %v407
          %v409 = vld [vmem:[%s4] sm:$0x1]
          %v411 = vperm.slane %v409, 0
          %v413 = vmul.f32 %v408, %v411
          %v414 = vld [vmem:[%s5] sm:$0x1]
          %v416 = vperm.slane %v414, 0
          %v418 = vadd.f32 %v413, %v416
          %419 = vst.msk [vmem:[%s275] sm:$0xff] %vm374, %v418
        $region52: #{tpu_custom_call.1} parent=43 // pred_fallthru
          _
        %s420 = sand.u32 %s178, 1
        %s421 = scalar_lea.sflag [#allocation4], %s420
        %s422 = sand.u32 %s178, 1
        %s423 = smul.addr %s422, 8
        %s424 = scalar_lea.vmem [#allocation3], %s423
        // Predicated region
        $region53: #{tpu_custom_call.1} parent=43 // pred_check
          %p425 = pneg %p188
        $region54: #{tpu_custom_call.1} parent=43 // pred_check_branch
          %427 = sbr.rel (%p425) target = $region56
        $region55: #{tpu_custom_call.1} parent=43 // pred_region
          %429 = vsyncadd %s421, 0
          %s430 = smul.addr %s24, 8
          %s431 = scalar_lea.hbm %s6, %s430
          %s433 = sshll.u32 %s424, 4
          %s434 = int_to_ptr.vmem [resolvable:$true] %s433
          %s435 = sshll.u32 %s431, 4
          %s436 = int_to_ptr.hbm [resolvable:$true] %s435
          %438 = dma.vmem_to_hbm [thread:$0]  %s434, 128, %s436, %s421
        $region56: #{tpu_custom_call.1} parent=43 // pred_fallthru
          _
      $region44: #{tpu_custom_call.1} parent=5 // pred_fallthru
        _
      %p439 = scmp.le.s32.totalorder 2, %s15
      // Predicated region
      $region57: #{tpu_custom_call.1} parent=5 // pred_check
        %p440 = pneg %p439
      $region58: #{tpu_custom_call.1} parent=5 // pred_check_branch
        %442 = sbr.rel (%p440) target = $region60
      $region59: #{tpu_custom_call.1} parent=5 // pred_region
        %s443 = ssub.s32 %s15, 2
        // Predicated region
        $region61: #{tpu_custom_call.1} parent=59 // pred_check
          %p444 = pneg %p194
        $region62: #{tpu_custom_call.1} parent=59 // pred_check_branch
          %446 = sbr.rel (%p444) target = $region64
        $region63: #{tpu_custom_call.1} parent=59 // pred_region
          %s447 = sand.u32 %s179, 1
          %s448 = scalar_lea.sflag [#allocation4], %s447
          %s449 = sand.u32 %s179, 1
          %s450 = smul.addr %s449, 8
          %s451 = scalar_lea.vmem [#allocation3], %s450
          %453 = dma.done %s448, 128
        $region64: #{tpu_custom_call.1} parent=59 // pred_fallthru
          _
      $region60: #{tpu_custom_call.1} parent=5 // pred_fallthru
        _
    $region6: #{tpu_custom_call.1} parent=1 // loop_footer
      %s19 = sadd.s32 1, %s15
    $region7: #{tpu_custom_call.1} parent=1 // loop_footer_branch
      %14 = sbr.rel target = $region3
    $region8: #{tpu_custom_call.1} parent=1 // loop_exit
      _
    %454 = vsyncpa [#allocation4], 1
    %s455 = scalar_lea.sflag [#allocation4], 1
    %456 = vsyncpa %s455, 1

</llo_original>
